<compile_context>
chip_gen: v6e
topology: v6e:2x2x1
jax: 0.10.0
libtpu: 0.0.40
codegen_flags: <defaults>
</compile_context>

<pallas_src>
import jax
import jax.numpy as jnp
from jax.experimental import pallas as pl
from jax.experimental.pallas import tpu as pltpu

LANE = 128
SUBLANE = 8


def ae_enc_kernel(x_ref, w1_ref, b1_ref, w2_ref, b2_ref, w3_ref, b3_ref, o_ref):
    # All three matmuls + ReLUs fused in one kernel invocation (MXU + VPU).
    x = x_ref[...]
    h1 = jnp.dot(x, w1_ref[...], preferred_element_type=jnp.float32) + b1_ref[...]
    h1 = jnp.maximum(h1, 0.0)
    h2 = jnp.dot(h1, w2_ref[...], preferred_element_type=jnp.float32) + b2_ref[...]
    h2 = jnp.maximum(h2, 0.0)
    z = jnp.dot(h2, w3_ref[...], preferred_element_type=jnp.float32) + b3_ref[...]
    o_ref[...] = z.astype(o_ref.dtype)


def _round_up(x, m):
    return ((x + m - 1) // m) * m


def _device_kind():
    try:
        return jax.devices()[0].device_kind.lower()
    except Exception:
        return ""


def ae_encode(x, params, *, batch_tile=None, vmem_limit_bytes=None):
    """Run the fused encoder kernel. x: (B, input_dim) float32 -> (B, latent_dim)."""
    B, D = x.shape
    w1, b1 = params["w1"], params["b1"]
    w2, b2 = params["w2"], params["b2"]
    w3, b3 = params["w3"], params["b3"]
    H1, H2, L = w1.shape[1], w2.shape[1], w3.shape[1]

    kind = _device_kind()

    # Batch tile: multiple of 8 (sublane constraint). Large enough to amortize the
    # ~0.35 us/step grid overhead, small enough that the ~7 lane-padded (tb, <=128)
    # VMEM buffers (x/out double-buffered + h1/h2/z temporaries) fit comfortably.
    if batch_tile is None:
        batch_tile = 4096 if "v5" in kind else 8192
    tb = max(SUBLANE, min(_round_up(batch_tile, SUBLANE), _round_up(B, SUBLANE)))

    # v7x has 2 TensorCores per chip: keep the grid length >= 2 so the "parallel"
    # batch axis actually shards across both cores instead of serializing on one.
    if "v7" in kind and B >= 2 * SUBLANE:
        tb = min(tb, _round_up(pl.cdiv(B, 2), SUBLANE))

    grid = (pl.cdiv(B, tb),)  # partial final block is masked by Pallas; no jnp.pad needed

    if vmem_limit_bytes is None:
        # ~3.5 KiB/row of lane-padded buffers -> tb=8192 is ~28-32 MiB; leave headroom.
        vmem_limit_bytes = (48 << 20) if "v7" in kind else (64 << 20)

    itemsize = jnp.dtype(x.dtype).itemsize
    flops = 2 * B * (D * H1 + H1 * H2 + H2 * L)
    bytes_accessed = (
        B * D * itemsize                        # x stream in
        + B * L * itemsize                      # z stream out (unpadded)
        + (D * H1 + H1 + H1 * H2 + H2 + H2 * L + L) * 4  # resident weights/biases
    )

    out = pl.pallas_call(
        ae_enc_kernel,
        out_shape=jax.ShapeDtypeStruct((B, L), x.dtype),
        grid_spec=pltpu.PrefetchScalarGridSpec(
            num_scalar_prefetch=0,
            grid=grid,
            in_specs=[
                pl.BlockSpec((tb, D), lambda i: (i, 0)),    # x tile (streamed per step)
                pl.BlockSpec((D, H1), lambda i: (0, 0)),    # w1 (resident)
                pl.BlockSpec((1, H1), lambda i: (0, 0)),    # b1
                pl.BlockSpec((H1, H2), lambda i: (0, 0)),   # w2
                pl.BlockSpec((1, H2), lambda i: (0, 0)),    # b2
                pl.BlockSpec((H2, L), lambda i: (0, 0)),    # w3
                pl.BlockSpec((1, L), lambda i: (0, 0)),     # b3
            ],
            out_specs=pl.BlockSpec((tb, L), lambda i: (i, 0)),
        ),
        compiler_params=pltpu.CompilerParams(
            dimension_semantics=("parallel",),
            vmem_limit_bytes=vmem_limit_bytes,
        ),
        cost_estimate=pl.CostEstimate(
            flops=flops, transcendentals=0, bytes_accessed=bytes_accessed
        ),
    )(x, w1, b1, w2, b2, w3, b3)

    return out


def init_params(key, input_dim, latent_dim):
    """Deterministic synthetic parameters with PyTorch Linear init-style bounds."""
    dims = [(input_dim, 64), (64, 32), (32, latent_dim)]
    params = {}
    for idx, (fan_in, fan_out) in enumerate(dims, start=1):
        key, kw, kb = jax.random.split(key, 3)
        bound = 1.0 / jnp.sqrt(fan_in)
        params[f"w{idx}"] = jax.random.uniform(
            kw, (fan_in, fan_out), jnp.float32, minval=-bound, maxval=bound
        )
        params[f"b{idx}"] = jax.random.uniform(
            kb, (1, fan_out), jnp.float32, minval=-bound, maxval=bound
        )
    return params


def ae_encode_ref(x, params):
    h1 = jnp.maximum(x @ params["w1"] + params["b1"], 0.0)
    h2 = jnp.maximum(h1 @ params["w2"] + params["b2"], 0.0)
    return h2 @ params["w3"] + params["b3"]


if __name__ == "__main__":
    key = jax.random.PRNGKey(0)
    input_dim, latent_dim = 32, 8

    kx1, kx2, kx3, kp = jax.random.split(key, 4)
    params = init_params(kp, input_dim, latent_dim)

    # Small batch (single-tile path, B multiple of 8).
    x_small = jax.random.normal(kx1, (8, input_dim), jnp.float32)
    z_small = ae_encode(x_small, params)
    jax.block_until_ready(z_small)
    assert z_small.shape == (8, latent_dim)
    assert jnp.allclose(z_small, ae_encode_ref(x_small, params), atol=1e-5, rtol=1e-5)

    # Non-divisible batch with explicit tiling (multi-step pipeline + partial last block).
    x_big = jax.random.normal(kx2, (520, input_dim), jnp.float32)
    z_big = ae_encode(x_big, params, batch_tile=256)
    jax.block_until_ready(z_big)
    assert z_big.shape == (520, latent_dim)
    assert jnp.allclose(z_big, ae_encode_ref(x_big, params), atol=1e-5, rtol=1e-5)

    # Batch that is not even a multiple of 8 (fully exercises masked partial-block stores).
    x_odd = jax.random.normal(kx3, (517, input_dim), jnp.float32)
    z_odd = ae_encode(x_odd, params, batch_tile=128)
    jax.block_until_ready(z_odd)
    assert z_odd.shape == (517, latent_dim)
    assert jnp.allclose(z_odd, ae_encode_ref(x_odd, params), atol=1e-5, rtol=1e-5)

    print("KERNEL_OK")
</pallas_src>

<mosaic_0001>
module attributes {stable_mosaic.version = 11 : i64} {
  func.func @ae_enc_kernel(%arg0: i32, %arg1: memref<8x32xf32, #tpu.memory_space<vmem>>, %arg2: memref<32x64xf32, #tpu.memory_space<vmem>>, %arg3: memref<1x64xf32, #tpu.memory_space<vmem>>, %arg4: memref<64x32xf32, #tpu.memory_space<vmem>>, %arg5: memref<1x32xf32, #tpu.memory_space<vmem>>, %arg6: memref<32x8xf32, #tpu.memory_space<vmem>>, %arg7: memref<1x8xf32, #tpu.memory_space<vmem>>, %arg8: memref<8x8xf32, #tpu.memory_space<vmem>>) attributes {dimension_semantics = [#tpu.dimension_semantics<parallel>], iteration_bounds = array<i64: 1>, scalar_prefetch = 0 : i64, scratch_operands = 0 : i64, tpu.core_type = #tpu.core_type<tc>, window_params = [{transform_indices = @transform_0, window_bounds = array<i64: 8, 32>}, {pipeline_mode = #tpu.pipeline_mode<synchronous>, transform_indices = @transform_1, window_bounds = array<i64: 32, 64>}, {pipeline_mode = #tpu.pipeline_mode<synchronous>, transform_indices = @transform_2, window_bounds = array<i64: 1, 64>}, {pipeline_mode = #tpu.pipeline_mode<synchronous>, transform_indices = @transform_3, window_bounds = array<i64: 64, 32>}, {pipeline_mode = #tpu.pipeline_mode<synchronous>, transform_indices = @transform_4, window_bounds = array<i64: 1, 32>}, {pipeline_mode = #tpu.pipeline_mode<synchronous>, transform_indices = @transform_5, window_bounds = array<i64: 32, 8>}, {pipeline_mode = #tpu.pipeline_mode<synchronous>, transform_indices = @transform_6, window_bounds = array<i64: 1, 8>}, {transform_indices = @transform_7, window_bounds = array<i64: 8, 8>}]} {
    %c0 = arith.constant 0 : index
    %c0_0 = arith.constant 0 : index
    %0 = vector.load %arg1[%c0, %c0_0] : memref<8x32xf32, #tpu.memory_space<vmem>>, vector<8x32xf32>
    %c0_1 = arith.constant 0 : index
    %c0_2 = arith.constant 0 : index
    %1 = vector.load %arg2[%c0_1, %c0_2] : memref<32x64xf32, #tpu.memory_space<vmem>>, vector<32x64xf32>
    %cst = arith.constant dense<0.000000e+00> : vector<8x64xf32>
    %2 = tpu.matmul %0, %1, %cst {dimension_numbers = #tpu.dot_dimension_numbers<[1], [0], [0], [1], [0, 0, 1, 1], [], []>} : vector<8x32xf32>, vector<32x64xf32>, vector<8x64xf32> -> vector<8x64xf32>
    %c0_3 = arith.constant 0 : index
    %c0_4 = arith.constant 0 : index
    %3 = vector.load %arg3[%c0_3, %c0_4] : memref<1x64xf32, #tpu.memory_space<vmem>>, vector<1x64xf32>
    %4 = vector.broadcast %3 : vector<1x64xf32> to vector<8x64xf32>
    %5 = arith.addf %2, %4 : vector<8x64xf32>
    %cst_5 = arith.constant 0.000000e+00 : f32
    %6 = vector.broadcast %cst_5 : f32 to vector<8x64xf32>
    %7 = arith.maximumf %5, %6 : vector<8x64xf32>
    %c0_6 = arith.constant 0 : index
    %c0_7 = arith.constant 0 : index
    %8 = vector.load %arg4[%c0_6, %c0_7] : memref<64x32xf32, #tpu.memory_space<vmem>>, vector<64x32xf32>
    %cst_8 = arith.constant dense<0.000000e+00> : vector<8x32xf32>
    %9 = tpu.matmul %7, %8, %cst_8 {dimension_numbers = #tpu.dot_dimension_numbers<[1], [0], [0], [1], [0, 0, 1, 1], [], []>} : vector<8x64xf32>, vector<64x32xf32>, vector<8x32xf32> -> vector<8x32xf32>
    %c0_9 = arith.constant 0 : index
    %c0_10 = arith.constant 0 : index
    %10 = vector.load %arg5[%c0_9, %c0_10] : memref<1x32xf32, #tpu.memory_space<vmem>>, vector<1x32xf32>
    %11 = vector.broadcast %10 : vector<1x32xf32> to vector<8x32xf32>
    %12 = arith.addf %9, %11 : vector<8x32xf32>
    %cst_11 = arith.constant 0.000000e+00 : f32
    %13 = vector.broadcast %cst_11 : f32 to vector<8x32xf32>
    %14 = arith.maximumf %12, %13 : vector<8x32xf32>
    %c0_12 = arith.constant 0 : index
    %c0_13 = arith.constant 0 : index
    %15 = vector.load %arg6[%c0_12, %c0_13] : memref<32x8xf32, #tpu.memory_space<vmem>>, vector<32x8xf32>
    %cst_14 = arith.constant dense<0.000000e+00> : vector<8x8xf32>
    %16 = tpu.matmul %14, %15, %cst_14 {dimension_numbers = #tpu.dot_dimension_numbers<[1], [0], [0], [1], [0, 0, 1, 1], [], []>} : vector<8x32xf32>, vector<32x8xf32>, vector<8x8xf32> -> vector<8x8xf32>
    %c0_15 = arith.constant 0 : index
    %c0_16 = arith.constant 0 : index
    %17 = vector.load %arg7[%c0_15, %c0_16] : memref<1x8xf32, #tpu.memory_space<vmem>>, vector<1x8xf32>
    %18 = vector.broadcast %17 : vector<1x8xf32> to vector<8x8xf32>
    %19 = arith.addf %16, %18 : vector<8x8xf32>
    %c0_17 = arith.constant 0 : index
    %c0_18 = arith.constant 0 : index
    %20 = vector.load %arg8[%c0_17, %c0_18] : memref<8x8xf32, #tpu.memory_space<vmem>>, vector<8x8xf32>
    tpu.vector_store %arg8[%c0_17, %c0_18], %19 {strides = array<i32>} : memref<8x8xf32, #tpu.memory_space<vmem>>, vector<8x8xf32>,
    return
  }
  func.func @transform_0(%arg0: i32) -> (i32, i32) {
    %c0_i32 = arith.constant 0 : i32
    %c0_i32_0 = arith.constant 0 : i32
    return %arg0, %c0_i32 : i32, i32
  }
  func.func @transform_1(%arg0: i32) -> (i32, i32) {
    %c0_i32 = arith.constant 0 : i32
    %c0_i32_0 = arith.constant 0 : i32
    %c0_i32_1 = arith.constant 0 : i32
    return %c0_i32, %c0_i32_0 : i32, i32
  }
  func.func @transform_2(%arg0: i32) -> (i32, i32) {
    %c0_i32 = arith.constant 0 : i32
    %c0_i32_0 = arith.constant 0 : i32
    %c0_i32_1 = arith.constant 0 : i32
    return %c0_i32, %c0_i32_0 : i32, i32
  }
  func.func @transform_3(%arg0: i32) -> (i32, i32) {
    %c0_i32 = arith.constant 0 : i32
    %c0_i32_0 = arith.constant 0 : i32
    %c0_i32_1 = arith.constant 0 : i32
    return %c0_i32, %c0_i32_0 : i32, i32
  }
  func.func @transform_4(%arg0: i32) -> (i32, i32) {
    %c0_i32 = arith.constant 0 : i32
    %c0_i32_0 = arith.constant 0 : i32
    %c0_i32_1 = arith.constant 0 : i32
    return %c0_i32, %c0_i32_0 : i32, i32
  }
  func.func @transform_5(%arg0: i32) -> (i32, i32) {
    %c0_i32 = arith.constant 0 : i32
    %c0_i32_0 = arith.constant 0 : i32
    %c0_i32_1 = arith.constant 0 : i32
    return %c0_i32, %c0_i32_0 : i32, i32
  }
  func.func @transform_6(%arg0: i32) -> (i32, i32) {
    %c0_i32 = arith.constant 0 : i32
    %c0_i32_0 = arith.constant 0 : i32
    %c0_i32_1 = arith.constant 0 : i32
    return %c0_i32, %c0_i32_0 : i32, i32
  }
  func.func @transform_7(%arg0: i32) -> (i32, i32) {
    %c0_i32 = arith.constant 0 : i32
    %c0_i32_0 = arith.constant 0 : i32
    return %arg0, %c0_i32 : i32, i32
  }
}

</mosaic_0001>

<llo_original>
// kernel: tpu_custom_call.1
$region0: #{tpu_custom_call.1}
  #allocation0 [shape = 'u32[]', space=smem, size = 0x4, offset = 0x4, fixed_abs, tag = 'smem constant byte address 0x4 - core index']
  #allocation1 [shape = 'u32[144,128]{1,0:T(1,128)}', space=vmem, size = 0x12000, scoped, tag = 'internal scratch']
  %s0 = inlined_call_operand.vmem [shape: f32[8,32], index: 0, kind: input, shape index: {}]
  %s1 = inlined_call_operand.vmem [shape: f32[32,64], index: 1, kind: input, shape index: {}]
  %s2 = inlined_call_operand.vmem [shape: f32[1,64], index: 2, kind: input, shape index: {}]
  %s3 = inlined_call_operand.vmem [shape: f32[64,32], index: 3, kind: input, shape index: {}]
  %s4 = inlined_call_operand.vmem [shape: f32[1,32], index: 4, kind: input, shape index: {}]
  %s5 = inlined_call_operand.vmem [shape: f32[32,8], index: 5, kind: input, shape index: {}]
  %s6 = inlined_call_operand.vmem [shape: f32[1,8], index: 6, kind: input, shape index: {}]
  %s7 = inlined_call_operand.hbm [shape: f32[8,8], index: 7, kind: output, shape index: {}]
  %s8 = sld [smem:[#allocation0]]
  $region38: #{tpu_custom_call.1} parent=0
    _
  %s10 = ssub.s32 1, %s8
  %s11 = scalar_select 0, %s10, %s8
  $region1: #{tpu_custom_call.1} parent=0
    #allocation2 [shape = 'u8[4096]{0}', space=vmem, size = 0x1000, scoped, tag = 'output window, operand 0, single buffered']
    #allocation3 [shape = 's32[1]{0}', space=sflag, size = 0x4, scoped, tag = 'scoped memory for tpu_custom_call.1']
    %12 = vsyncpa [#allocation3], 0
    // Predicated region
    $region2: #{tpu_custom_call.1} parent=1 // pred_check
      _
    $region3: #{tpu_custom_call.1} parent=1 // pred_check_branch
      %14 = sbr.rel (0) target = $region5
    $region4: #{tpu_custom_call.1} parent=1 // pred_region
      _
    $region5: #{tpu_custom_call.1} parent=1 // pred_fallthru
      _
    // Predicated region
    $region6: #{tpu_custom_call.1} parent=1 // pred_check
      _
    $region7: #{tpu_custom_call.1} parent=1 // pred_check_branch
      %16 = sbr.rel (0) target = $region9
    $region8: #{tpu_custom_call.1} parent=1 // pred_region
      _
    $region9: #{tpu_custom_call.1} parent=1 // pred_fallthru
      _
    // Predicated region
    $region10: #{tpu_custom_call.1} parent=1 // pred_check
      _
    $region11: #{tpu_custom_call.1} parent=1 // pred_check_branch
      %18 = sbr.rel (0) target = $region13
    $region12: #{tpu_custom_call.1} parent=1 // pred_region
      _
    $region13: #{tpu_custom_call.1} parent=1 // pred_fallthru
      _
    // Predicated region
    $region14: #{tpu_custom_call.1} parent=1 // pred_check
      _
    $region15: #{tpu_custom_call.1} parent=1 // pred_check_branch
      %20 = sbr.rel (0) target = $region17
    $region16: #{tpu_custom_call.1} parent=1 // pred_region
      _
    $region17: #{tpu_custom_call.1} parent=1 // pred_fallthru
      _
    // Predicated region
    $region18: #{tpu_custom_call.1} parent=1 // pred_check
      _
    $region19: #{tpu_custom_call.1} parent=1 // pred_check_branch
      %22 = sbr.rel (0) target = $region21
    $region20: #{tpu_custom_call.1} parent=1 // pred_region
      _
    $region21: #{tpu_custom_call.1} parent=1 // pred_fallthru
      _
    // Predicated region
    $region22: #{tpu_custom_call.1} parent=1 // pred_check
      _
    $region23: #{tpu_custom_call.1} parent=1 // pred_check_branch
      %24 = sbr.rel (0) target = $region25
    $region24: #{tpu_custom_call.1} parent=1 // pred_region
      _
    $region25: #{tpu_custom_call.1} parent=1 // pred_fallthru
      _
    // Predicated region
    $region26: #{tpu_custom_call.1} parent=1 // pred_check
      _
    $region27: #{tpu_custom_call.1} parent=1 // pred_check_branch
      %26 = sbr.rel (0) target = $region29
    $region28: #{tpu_custom_call.1} parent=1 // pred_region
      _
    $region29: #{tpu_custom_call.1} parent=1 // pred_fallthru
      _
    %v27 = vld [vmem:[%s0] sm:$0xff]
    %v28 = vld [vmem:[%s1] sm:$0xff]
    %v29 = vld [vmem:[%s1 + $0x8] sm:$0xff]
    %v30 = vld [vmem:[%s1 + $0x10] sm:$0xff]
    %v31 = vld [vmem:[%s1 + $0x18] sm:$0xff]
    %v32 = vld [vmem:[%s2] sm:$0x1]
    %v34 = vlaneseq
    %v35 = vshrl.u32 %v34, 7
    %v36 = vsub.s32 0, %v35
    %v37 = vrot.slane %v32, %v36
    %vm39 = vcmask 261120
    %v41 = vsel %vm39, %v27, 0
    %43 = vmatprep.subr.mxu0 0.0
    %44 = vmatpush1.msra.mxu0 0.0
    %45 = vmatprep.subr.mxu0 0.0
    %46 = vmatpush1.msra.mxu0 0.0
    %47 = vmatprep.subr.mxu0 0.0
    %48 = vmatpush1.msra.mxu0 0.0
    %49 = vmatprep.subr.mxu0 0.0
    %50 = vmatpush1.msra.mxu0 0.0
    %51 = vmatprep.subr.mxu0 0.0
    %52 = vmatpush1.msra.mxu0 0.0
    %53 = vmatprep.subr.mxu0 0.0
    %54 = vmatpush1.msra.mxu0 0.0
    %55 = vmatprep.subr.mxu0 0.0
    %56 = vmatpush1.msra.mxu0 0.0
    %57 = vmatprep.subr.mxu0 0.0
    %58 = vmatpush1.msra.mxu0 0.0
    %59 = vmatprep.subr.mxu0 0.0
    %60 = vmatpush1.msra.mxu0 0.0
    %61 = vmatprep.subr.mxu0 0.0
    %62 = vmatpush1.msra.mxu0 0.0
    %63 = vmatprep.subr.mxu0 0.0
    %64 = vmatpush1.msra.mxu0 0.0
    %65 = vmatprep.subr.mxu0 0.0
    %66 = vmatpush1.msra.mxu0 0.0
    %67 = vmatprep.subr.mxu0 0.0
    %68 = vmatpush1.msra.mxu0 %v31
    %69 = vmatprep.subr.mxu0 0.0
    %70 = vmatpush1.msra.mxu0 %v30
    %71 = vmatprep.subr.mxu0 0.0
    %72 = vmatpush1.msra.mxu0 %v29
    %73 = vmatprep.subr.mxu0 0.0
    %74 = vmatpush1.msra.mxu0 %v28
    %75 = vmatprep.subr.mxu0 0.0
    %76 = vmatpush2.msra.mxu0 0.0
    %77 = vmatprep.subr.mxu0 0.0
    %78 = vmatpush2.msra.mxu0 0.0
    %79 = vmatprep.subr.mxu0 0.0
    %80 = vmatpush2.msra.mxu0 0.0
    %81 = vmatprep.subr.mxu0 0.0
    %82 = vmatpush2.msra.mxu0 0.0
    %83 = vmatprep.subr.mxu0 0.0
    %84 = vmatpush2.msra.mxu0 0.0
    %85 = vmatprep.subr.mxu0 0.0
    %86 = vmatpush2.msra.mxu0 0.0
    %87 = vmatprep.subr.mxu0 0.0
    %88 = vmatpush2.msra.mxu0 0.0
    %89 = vmatprep.subr.mxu0 0.0
    %90 = vmatpush2.msra.mxu0 0.0
    %91 = vmatprep.subr.mxu0 0.0
    %92 = vmatpush2.msra.mxu0 0.0
    %93 = vmatprep.subr.mxu0 0.0
    %94 = vmatpush2.msra.mxu0 0.0
    %95 = vmatprep.subr.mxu0 0.0
    %96 = vmatpush2.msra.mxu0 0.0
    %97 = vmatprep.subr.mxu0 0.0
    %98 = vmatpush2.msra.mxu0 0.0
    %99 = vmatprep.subr.mxu0 0.0
    %100 = vmatpush2.msra.mxu0 0.0
    %101 = vmatprep.subr.mxu0 0.0
    %102 = vmatpush2.msra.mxu0 0.0
    %103 = vmatprep.subr.mxu0 0.0
    %104 = vmatpush2.msra.mxu0 0.0
    %105 = vmatprep.subr.mxu0 0.0
    %106 = vmatpush2.msra.mxu0 0.0
    %107 = vmatprep.mubr.f32.mxu0 0.0
    %108 = vmatmul.mubr.f32.gmra.mxu0 %v41
    %v109 = vpop.f32.mrf.mxu0
    %v110 = vadd.f32 %v37, %v109
    %v111 = vpop.f32.mrf.mxu0
    %112 = vdwg.mxu0
    %v113 = vmax.f32 %v110, 0.0
    %v114 = vld [vmem:[%s3] sm:$0xff]
    %v115 = vld [vmem:[%s3 + $0x8] sm:$0xff]
    %v116 = vld [vmem:[%s3 + $0x10] sm:$0xff]
    %v117 = vld [vmem:[%s3 + $0x18] sm:$0xff]
    %v118 = vld [vmem:[%s3 + $0x20] sm:$0xff]
    %v119 = vld [vmem:[%s3 + $0x28] sm:$0xff]
    %v120 = vld [vmem:[%s3 + $0x30] sm:$0xff]
    %v121 = vld [vmem:[%s3 + $0x38] sm:$0xff]
    %v122 = vld [vmem:[%s4] sm:$0x1]
    %v124 = vlaneseq
    %v125 = vshrl.u32 %v124, 7
    %v126 = vsub.s32 0, %v125
    %v127 = vrot.slane %v122, %v126
    %vm129 = vcmask 523264
    %v131 = vsel %vm129, %v113, 0
    %133 = vmatprep.subr.mxu0 0.0
    %134 = vmatpush1.msra.mxu0 0.0
    %135 = vmatprep.subr.mxu0 0.0
    %136 = vmatpush1.msra.mxu0 0.0
    %137 = vmatprep.subr.mxu0 0.0
    %138 = vmatpush1.msra.mxu0 0.0
    %139 = vmatprep.subr.mxu0 0.0
    %140 = vmatpush1.msra.mxu0 0.0
    %141 = vmatprep.subr.mxu0 0.0
    %142 = vmatpush1.msra.mxu0 0.0
    %143 = vmatprep.subr.mxu0 0.0
    %144 = vmatpush1.msra.mxu0 0.0
    %145 = vmatprep.subr.mxu0 0.0
    %146 = vmatpush1.msra.mxu0 0.0
    %147 = vmatprep.subr.mxu0 0.0
    %148 = vmatpush1.msra.mxu0 0.0
    %149 = vmatprep.subr.mxu0 0.0
    %150 = vmatpush1.msra.mxu0 %v121
    %151 = vmatprep.subr.mxu0 0.0
    %152 = vmatpush1.msra.mxu0 %v120
    %153 = vmatprep.subr.mxu0 0.0
    %154 = vmatpush1.msra.mxu0 %v119
    %155 = vmatprep.subr.mxu0 0.0
    %156 = vmatpush1.msra.mxu0 %v118
    %157 = vmatprep.subr.mxu0 0.0
    %158 = vmatpush1.msra.mxu0 %v117
    %159 = vmatprep.subr.mxu0 0.0
    %160 = vmatpush1.msra.mxu0 %v116
    %161 = vmatprep.subr.mxu0 0.0
    %162 = vmatpush1.msra.mxu0 %v115
    %163 = vmatprep.subr.mxu0 0.0
    %164 = vmatpush1.msra.mxu0 %v114
    %165 = vmatprep.subr.mxu0 0.0
    %166 = vmatpush2.msra.mxu0 0.0
    %167 = vmatprep.subr.mxu0 0.0
    %168 = vmatpush2.msra.mxu0 0.0
    %169 = vmatprep.subr.mxu0 0.0
    %170 = vmatpush2.msra.mxu0 0.0
    %171 = vmatprep.subr.mxu0 0.0
    %172 = vmatpush2.msra.mxu0 0.0
    %173 = vmatprep.subr.mxu0 0.0
    %174 = vmatpush2.msra.mxu0 0.0
    %175 = vmatprep.subr.mxu0 0.0
    %176 = vmatpush2.msra.mxu0 0.0
    %177 = vmatprep.subr.mxu0 0.0
    %178 = vmatpush2.msra.mxu0 0.0
    %179 = vmatprep.subr.mxu0 0.0
    %180 = vmatpush2.msra.mxu0 0.0
    %181 = vmatprep.subr.mxu0 0.0
    %182 = vmatpush2.msra.mxu0 0.0
    %183 = vmatprep.subr.mxu0 0.0
    %184 = vmatpush2.msra.mxu0 0.0
    %185 = vmatprep.subr.mxu0 0.0
    %186 = vmatpush2.msra.mxu0 0.0
    %187 = vmatprep.subr.mxu0 0.0
    %188 = vmatpush2.msra.mxu0 0.0
    %189 = vmatprep.subr.mxu0 0.0
    %190 = vmatpush2.msra.mxu0 0.0
    %191 = vmatprep.subr.mxu0 0.0
    %192 = vmatpush2.msra.mxu0 0.0
    %193 = vmatprep.subr.mxu0 0.0
    %194 = vmatpush2.msra.mxu0 0.0
    %195 = vmatprep.subr.mxu0 0.0
    %196 = vmatpush2.msra.mxu0 0.0
    %197 = vmatprep.mubr.f32.mxu0 0.0
    %198 = vmatmul.mubr.f32.gmra.mxu0 %v131
    %v199 = vpop.f32.mrf.mxu0
    %v200 = vadd.f32 %v127, %v199
    %v201 = vpop.f32.mrf.mxu0
    %202 = vdwg.mxu0
    %v203 = vmax.f32 %v200, 0.0
    %v204 = vld [vmem:[%s5] sm:$0xff]
    %v205 = vld [vmem:[%s5 + $0x8] sm:$0xff]
    %v206 = vld [vmem:[%s5 + $0x10] sm:$0xff]
    %v207 = vld [vmem:[%s5 + $0x18] sm:$0xff]
    %v208 = vld [vmem:[%s6] sm:$0x1]
    %v210 = vlaneseq
    %v211 = vshrl.u32 %v210, 7
    %v212 = vsub.s32 0, %v211
    %v213 = vrot.slane %v208, %v212
    %v216 = vsel %vm39, %v203, 0
    %218 = vmatprep.subr.mxu0 0.0
    %219 = vmatpush1.msra.mxu0 0.0
    %220 = vmatprep.subr.mxu0 0.0
    %221 = vmatpush1.msra.mxu0 0.0
    %222 = vmatprep.subr.mxu0 0.0
    %223 = vmatpush1.msra.mxu0 0.0
    %224 = vmatprep.subr.mxu0 0.0
    %225 = vmatpush1.msra.mxu0 0.0
    %226 = vmatprep.subr.mxu0 0.0
    %227 = vmatpush1.msra.mxu0 0.0
    %228 = vmatprep.subr.mxu0 0.0
    %229 = vmatpush1.msra.mxu0 0.0
    %230 = vmatprep.subr.mxu0 0.0
    %231 = vmatpush1.msra.mxu0 0.0
    %232 = vmatprep.subr.mxu0 0.0
    %233 = vmatpush1.msra.mxu0 0.0
    %234 = vmatprep.subr.mxu0 0.0
    %235 = vmatpush1.msra.mxu0 0.0
    %236 = vmatprep.subr.mxu0 0.0
    %237 = vmatpush1.msra.mxu0 0.0
    %238 = vmatprep.subr.mxu0 0.0
    %239 = vmatpush1.msra.mxu0 0.0
    %240 = vmatprep.subr.mxu0 0.0
    %241 = vmatpush1.msra.mxu0 0.0
    %242 = vmatprep.subr.mxu0 0.0
    %243 = vmatpush1.msra.mxu0 %v207
    %244 = vmatprep.subr.mxu0 0.0
    %245 = vmatpush1.msra.mxu0 %v206
    %246 = vmatprep.subr.mxu0 0.0
    %247 = vmatpush1.msra.mxu0 %v205
    %248 = vmatprep.subr.mxu0 0.0
    %249 = vmatpush1.msra.mxu0 %v204
    %250 = vmatprep.subr.mxu0 0.0
    %251 = vmatpush2.msra.mxu0 0.0
    %252 = vmatprep.subr.mxu0 0.0
    %253 = vmatpush2.msra.mxu0 0.0
    %254 = vmatprep.subr.mxu0 0.0
    %255 = vmatpush2.msra.mxu0 0.0
    %256 = vmatprep.subr.mxu0 0.0
    %257 = vmatpush2.msra.mxu0 0.0
    %258 = vmatprep.subr.mxu0 0.0
    %259 = vmatpush2.msra.mxu0 0.0
    %260 = vmatprep.subr.mxu0 0.0
    %261 = vmatpush2.msra.mxu0 0.0
    %262 = vmatprep.subr.mxu0 0.0
    %263 = vmatpush2.msra.mxu0 0.0
    %264 = vmatprep.subr.mxu0 0.0
    %265 = vmatpush2.msra.mxu0 0.0
    %266 = vmatprep.subr.mxu0 0.0
    %267 = vmatpush2.msra.mxu0 0.0
    %268 = vmatprep.subr.mxu0 0.0
    %269 = vmatpush2.msra.mxu0 0.0
    %270 = vmatprep.subr.mxu0 0.0
    %271 = vmatpush2.msra.mxu0 0.0
    %272 = vmatprep.subr.mxu0 0.0
    %273 = vmatpush2.msra.mxu0 0.0
    %274 = vmatprep.subr.mxu0 0.0
    %275 = vmatpush2.msra.mxu0 0.0
    %276 = vmatprep.subr.mxu0 0.0
    %277 = vmatpush2.msra.mxu0 0.0
    %278 = vmatprep.subr.mxu0 0.0
    %279 = vmatpush2.msra.mxu0 0.0
    %280 = vmatprep.subr.mxu0 0.0
    %281 = vmatpush2.msra.mxu0 0.0
    %282 = vmatprep.mubr.f32.mxu0 0.0
    %283 = vmatmul.mubr.f32.gmra.mxu0 %v216
    %v284 = vpop.f32.mrf.mxu0
    %v285 = vadd.f32 %v213, %v284
    %v286 = vpop.f32.mrf.mxu0
    %287 = vdwg.mxu0
    %vm288 = vcmask 64512
    %289 = vst.msk [vmem:[#allocation2] sm:$0xff] %vm288, %v285
    // Predicated region
    $region30: #{tpu_custom_call.1} parent=1 // pred_check
      _
    $region31: #{tpu_custom_call.1} parent=1 // pred_check_branch
      %291 = sbr.rel (0) target = $region33
    $region32: #{tpu_custom_call.1} parent=1 // pred_region
      %s293 = ssub.s32 128, 128
      %294 = vsyncadd [#allocation3], %s293
      %s296 = sshll.u32 [#allocation2], 4
      %s297 = int_to_ptr.vmem [resolvable:$true] %s296
      %299 = dma.vmem_to_hbm [thread:$0]  %s297, 128, %s7, [#allocation3]
    $region33: #{tpu_custom_call.1} parent=1 // pred_fallthru
      _
    // Predicated region
    $region34: #{tpu_custom_call.1} parent=1 // pred_check
      _
    $region35: #{tpu_custom_call.1} parent=1 // pred_check_branch
      %301 = sbr.rel (0) target = $region37
    $region36: #{tpu_custom_call.1} parent=1 // pred_region
      %302 = dma.done [#allocation3], 128
    $region37: #{tpu_custom_call.1} parent=1 // pred_fallthru
      _
    %303 = vsyncpa [#allocation3], 1

</llo_original>
